<compile_context>
chip_gen: v7x
topology: tpu7x:2x2x1
jax: 0.10.0
libtpu: 0.0.40
codegen_flags: <defaults>
</compile_context>

<pallas_src>
import jax
import jax.numpy as jnp
from jax.experimental import pallas as pl
from jax.experimental.pallas import tpu as pltpu

# ---- small, module-consistent dims (scaled-down swin_large head) -----------
B      = 8     # batch
C_BB   = 128   # backbone pooled feature dim           (1536 in the real model)
C_CONV = 256   # img1x1conv3 out_channels              (2048)
DIM    = 128   # img_fc out dim                        (1024)
C2     = 128   # early_stage[1] channel dim            ( 768)
C3     = 128   # early_stage[2] channel dim            (1536)
L2     = 16    # early_stage[1] token count
L3     = 8     # early_stage[2] token count
C_CAT  = DIM + C2 + C3   # final_fc in_features        (3328) -- dead path, kept for fidelity
H = W  = 16    # small image

TN = 128       # streaming tile along C_CONV.  Real dims: 512.
N_TILES = C_CONV // TN

GEM_P   = 3.0
GEM_EPS = 1e-6


# --------------------------- Pallas kernel ----------------------------------
def _head_kernel(feat_ref, wconv_ref, wfc_ref, bfc_ref,
                 conv_ref, imgfeat_ref, acc_ref):
    n = pl.program_id(0)

    @pl.when(n == 0)
    def _():
        acc_ref[...] = jnp.zeros_like(acc_ref)

    # feat arrives f32; cast to bf16 in-kernel (free VPU op, no wrapper dispatch).
    feat_bf = feat_ref[...].astype(jnp.bfloat16)

    # img1x1conv3: 1x1 conv (no bias) on (B, C_BB, 1, 1) == matmul on (B, C_BB).
    # bf16 operands, f32 MXU accumulation.  This step's N-tile of the conv out.
    conv = jnp.dot(feat_bf, wconv_ref[...],
                   preferred_element_type=jnp.float32)            # (B, TN) f32
    conv_ref[...] = conv                                          # "imgs" / low_level_feature tile

    # GeM(p=3) over a 1x1 spatial extent reduces exactly to clamp(x, eps):
    # the mean between the two powers is over a single element.
    g = jnp.maximum(conv, GEM_EPS)

    # img_fc partial product for this K-tile, accumulated in f32 VMEM scratch.
    acc_ref[...] += jnp.dot(g.astype(jnp.bfloat16), wfc_ref[...],
                            preferred_element_type=jnp.float32)

    @pl.when(n == pl.num_programs(0) - 1)
    def _():
        imgfeat_ref[...] = acc_ref[...] + bfc_ref[...]
    # NOTE: stage2/stage3 avg-pool + final_fc + (final + imgs) only feed the
    # torch forward's discarded `imgs_final`; intentionally not computed.


@jax.jit
def img_backbone_head(feat, w_conv_bf, w_fc_bf, b_fc):
    """Everything after the swin backbone that feeds the returned outputs,
    fused into one streaming-K Pallas kernel.  Weights must already be bf16."""
    conv, img_feat = pl.pallas_call(
        _head_kernel,
        out_shape=(
            jax.ShapeDtypeStruct((B, C_CONV), jnp.float32),  # conv ("imgs")
            jax.ShapeDtypeStruct((B, DIM),    jnp.float32),  # img_feature
        ),
        grid_spec=pltpu.PrefetchScalarGridSpec(
            num_scalar_prefetch=0,
            grid=(N_TILES,),
            in_specs=[
                pl.BlockSpec((B, C_BB),   lambda n: (0, 0)),   # feat (f32, cast in kernel)
                pl.BlockSpec((C_BB, TN),  lambda n: (0, n)),   # w_conv bf16 N-tile
                pl.BlockSpec((TN, DIM),   lambda n: (n, 0)),   # w_fc   bf16 K-tile
                pl.BlockSpec((1, DIM),    lambda n: (0, 0)),   # b_fc   f32
            ],
            out_specs=[
                pl.BlockSpec((B, TN),  lambda n: (0, n)),      # conv tile
                pl.BlockSpec((B, DIM), lambda n: (0, 0)),      # img_feature (resident)
            ],
            scratch_shapes=[pltpu.VMEM((B, DIM), jnp.float32)],
        ),
        compiler_params=pltpu.CompilerParams(
            dimension_semantics=("arbitrary",)),   # fc reduction axis
    )(feat, w_conv_bf, w_fc_bf, b_fc)

    imgs = conv.reshape(B, C_CONV, 1, 1)           # matches torch (B, 2048, 1, 1)
    return imgs, img_feat, imgs                    # (imgs, img_feature, low_level_feature)


# -------------------- stand-in backbone (plain JAX glue) --------------------
# TODO(synk): the pretrained timm Swin-L transformer has no clean Pallas
# equivalent; this deterministic stand-in only produces tensors with the same
# shapes/roles (pooled feature + two intermediate token stages).  The token
# stages feed only the discarded final_fc path in the torch forward.
def standin_swin_backbone(x, bb):
    Bx = x.shape[0]
    pooled = jnp.tanh(x.mean(axis=(2, 3)) @ bb["w_pool"])                     # (B, C_BB)
    t2 = x.reshape(Bx, 3, 4, H // 4, 4, W // 4).mean(axis=(3, 5))             # (B,3,4,4)
    t2 = t2.reshape(Bx, 3, L2).transpose(0, 2, 1) @ bb["w_s2"]                # (B,L2,C2)
    t3 = x.reshape(Bx, 3, 2, H // 2, 4, W // 4).mean(axis=(3, 5))             # (B,3,2,4)
    t3 = t3.reshape(Bx, 3, L3).transpose(0, 2, 1) @ bb["w_s3"]                # (B,L3,C3)
    return pooled, t2, t3


def init_params(key):
    ks = jax.random.split(key, 8)
    s = lambda fan_in: 1.0 / jnp.sqrt(jnp.float32(fan_in))
    head = {
        "w_conv":  jax.random.normal(ks[0], (C_BB, C_CONV),  jnp.float32) * s(C_BB),
        "w_fc":    jax.random.normal(ks[1], (C_CONV, DIM),   jnp.float32) * s(C_CONV),
        "b_fc":    jax.random.normal(ks[2], (1, DIM),        jnp.float32) * 0.01,
        # final_fc parameters exist in the module but only feed the discarded
        # `imgs_final`; kept for structural fidelity, never consumed.
        "w_final": jax.random.normal(ks[3], (C_CAT, C_CONV), jnp.float32) * s(C_CAT),
        "b_final": jax.random.normal(ks[4], (1, C_CONV),     jnp.float32) * 0.01,
    }
    bb = {
        "w_pool": jax.random.normal(ks[5], (3, C_BB), jnp.float32) * s(3),
        "w_s2":   jax.random.normal(ks[6], (3, C2),   jnp.float32) * s(3),
        "w_s3":   jax.random.normal(ks[7], (3, C3),   jnp.float32) * s(3),
    }
    return head, bb


def prepare_head_params(p):
    """One-time bf16 conversion of the matmul weights (done ONCE, not per call)."""
    return {
        "w_conv": p["w_conv"].astype(jnp.bfloat16),
        "w_fc":   p["w_fc"].astype(jnp.bfloat16),
        "b_fc":   p["b_fc"],                       # bias stays f32 (post-accum add)
    }


def head_reference(feat, w_conv_bf, w_fc_bf, b_fc):
    """Plain-JAX reference following the same bf16-compute / f32-accumulate path."""
    f_bf = feat.astype(jnp.bfloat16)
    conv = jnp.dot(f_bf, w_conv_bf, preferred_element_type=jnp.float32)
    g = jnp.maximum(conv, GEM_EPS)                 # GeM over 1x1 spatial == clamp
    img_feat = jnp.dot(g.astype(jnp.bfloat16), w_fc_bf,
                       preferred_element_type=jnp.float32) + b_fc
    return conv, img_feat


if __name__ == "__main__":
    key = jax.random.PRNGKey(0)
    k_img, k_par = jax.random.split(key)
    imgs_in = jax.random.normal(k_img, (B, 3, H, W), jnp.float32)   # NCHW like torch
    head_p, bb_p = init_params(k_par)

    # one-time weight cast (cached bf16 params), materialized before timing/calls
    head_bf = prepare_head_params(head_p)
    head_bf = {k: jax.block_until_ready(v) for k, v in head_bf.items()}

    feat, s2, s3 = standin_swin_backbone(imgs_in, bb_p)             # s2/s3 feed only the dead path

    imgs, img_feature, low_level_feature = img_backbone_head(
        feat, head_bf["w_conv"], head_bf["w_fc"], head_bf["b_fc"])
    jax.block_until_ready((imgs, img_feature, low_level_feature))

    # correctness check against a plain-JAX reference of the head
    ref_conv, ref_feat = head_reference(
        feat, head_bf["w_conv"], head_bf["w_fc"], head_bf["b_fc"])
    assert imgs.shape == (B, C_CONV, 1, 1)
    assert img_feature.shape == (B, DIM)
    assert jnp.allclose(imgs.reshape(B, C_CONV), ref_conv, rtol=1e-2, atol=1e-2)
    assert jnp.allclose(img_feature, ref_feat, rtol=1e-2, atol=1e-2)
    assert jnp.array_equal(imgs, low_level_feature)

    print("KERNEL_OK")
</pallas_src>

<mosaic_0001>
module attributes {stable_mosaic.version = 11 : i64} {
  func.func @_head_kernel(%arg0: i32, %arg1: memref<8x128xf32, #tpu.memory_space<vmem>>, %arg2: memref<128x128xbf16, #tpu.memory_space<vmem>>, %arg3: memref<128x128xbf16, #tpu.memory_space<vmem>>, %arg4: memref<1x128xf32, #tpu.memory_space<vmem>>, %arg5: memref<8x128xf32, #tpu.memory_space<vmem>>, %arg6: memref<8x128xf32, #tpu.memory_space<vmem>>, %arg7: memref<8x128xf32, #tpu.memory_space<vmem>>) attributes {dimension_semantics = [#tpu.dimension_semantics<arbitrary>], iteration_bounds = array<i64: 2>, scalar_prefetch = 0 : i64, scratch_operands = 1 : i64, tpu.core_type = #tpu.core_type<tc>, window_params = [{pipeline_mode = #tpu.pipeline_mode<synchronous>, transform_indices = @transform_0, window_bounds = array<i64: 8, 128>}, {transform_indices = @transform_1, window_bounds = array<i64: 128, 128>}, {transform_indices = @transform_2, window_bounds = array<i64: 128, 128>}, {pipeline_mode = #tpu.pipeline_mode<synchronous>, transform_indices = @transform_3, window_bounds = array<i64: 1, 128>}, {transform_indices = @transform_4, window_bounds = array<i64: 8, 128>}, {pipeline_mode = #tpu.pipeline_mode<synchronous>, transform_indices = @transform_5, window_bounds = array<i64: 8, 128>}]} {
    %c0_i32 = arith.constant 0 : i32
    %0 = arith.cmpi eq, %arg0, %c0_i32 : i32
    %1 = arith.extui %0 : i1 to i32
    %c0_i32_0 = arith.constant 0 : i32
    %2 = arith.cmpi ne, %1, %c0_i32_0 : i32
    scf.if %2 {
      %cst_15 = arith.constant 0.000000e+00 : f32
      %19 = vector.broadcast %cst_15 : f32 to vector<8x128xf32>
      %c0_16 = arith.constant 0 : index
      %c0_17 = arith.constant 0 : index
      %20 = vector.load %arg7[%c0_16, %c0_17] : memref<8x128xf32, #tpu.memory_space<vmem>>, vector<8x128xf32>
      tpu.vector_store %arg7[%c0_16, %c0_17], %19 {strides = array<i32>} : memref<8x128xf32, #tpu.memory_space<vmem>>, vector<8x128xf32>,
    } else {
    }
    %c0 = arith.constant 0 : index
    %c0_1 = arith.constant 0 : index
    %3 = vector.load %arg1[%c0, %c0_1] : memref<8x128xf32, #tpu.memory_space<vmem>>, vector<8x128xf32>
    %4 = arith.truncf %3 : vector<8x128xf32> to vector<8x128xbf16>
    %c0_2 = arith.constant 0 : index
    %c0_3 = arith.constant 0 : index
    %5 = vector.load %arg2[%c0_2, %c0_3] : memref<128x128xbf16, #tpu.memory_space<vmem>>, vector<128x128xbf16>
    %cst = arith.constant dense<0.000000e+00> : vector<8x128xf32>
    %6 = tpu.matmul %4, %5, %cst {dimension_numbers = #tpu.dot_dimension_numbers<[1], [0], [0], [1], [0, 0, 1, 1], [], []>} : vector<8x128xbf16>, vector<128x128xbf16>, vector<8x128xf32> -> vector<8x128xf32>
    %c0_4 = arith.constant 0 : index
    %c0_5 = arith.constant 0 : index
    %7 = vector.load %arg5[%c0_4, %c0_5] : memref<8x128xf32, #tpu.memory_space<vmem>>, vector<8x128xf32>
    tpu.vector_store %arg5[%c0_4, %c0_5], %6 {strides = array<i32>} : memref<8x128xf32, #tpu.memory_space<vmem>>, vector<8x128xf32>,
    %cst_6 = arith.constant 9.99999997E-7 : f32
    %8 = vector.broadcast %cst_6 : f32 to vector<8x128xf32>
    %9 = arith.maximumf %6, %8 : vector<8x128xf32>
    %c0_7 = arith.constant 0 : index
    %c0_8 = arith.constant 0 : index
    %10 = vector.load %arg7[%c0_7, %c0_8] : memref<8x128xf32, #tpu.memory_space<vmem>>, vector<8x128xf32>
    %11 = arith.truncf %9 : vector<8x128xf32> to vector<8x128xbf16>
    %c0_9 = arith.constant 0 : index
    %c0_10 = arith.constant 0 : index
    %12 = vector.load %arg3[%c0_9, %c0_10] : memref<128x128xbf16, #tpu.memory_space<vmem>>, vector<128x128xbf16>
    %cst_11 = arith.constant dense<0.000000e+00> : vector<8x128xf32>
    %13 = tpu.matmul %11, %12, %cst_11 {dimension_numbers = #tpu.dot_dimension_numbers<[1], [0], [0], [1], [0, 0, 1, 1], [], []>} : vector<8x128xbf16>, vector<128x128xbf16>, vector<8x128xf32> -> vector<8x128xf32>
    %14 = arith.addf %10, %13 : vector<8x128xf32>
    %c0_12 = arith.constant 0 : index
    %c0_13 = arith.constant 0 : index
    %15 = vector.load %arg7[%c0_12, %c0_13] : memref<8x128xf32, #tpu.memory_space<vmem>>, vector<8x128xf32>
    tpu.vector_store %arg7[%c0_12, %c0_13], %14 {strides = array<i32>} : memref<8x128xf32, #tpu.memory_space<vmem>>, vector<8x128xf32>,
    %c1_i32 = arith.constant 1 : i32
    %16 = arith.cmpi eq, %arg0, %c1_i32 : i32
    %17 = arith.extui %16 : i1 to i32
    %c0_i32_14 = arith.constant 0 : i32
    %18 = arith.cmpi ne, %17, %c0_i32_14 : i32
    scf.if %18 {
      %c0_15 = arith.constant 0 : index
      %c0_16 = arith.constant 0 : index
      %19 = vector.load %arg7[%c0_15, %c0_16] : memref<8x128xf32, #tpu.memory_space<vmem>>, vector<8x128xf32>
      %c0_17 = arith.constant 0 : index
      %c0_18 = arith.constant 0 : index
      %20 = vector.load %arg4[%c0_17, %c0_18] : memref<1x128xf32, #tpu.memory_space<vmem>>, vector<1x128xf32>
      %21 = vector.broadcast %20 : vector<1x128xf32> to vector<8x128xf32>
      %22 = arith.addf %19, %21 : vector<8x128xf32>
      %c0_19 = arith.constant 0 : index
      %c0_20 = arith.constant 0 : index
      %23 = vector.load %arg6[%c0_19, %c0_20] : memref<8x128xf32, #tpu.memory_space<vmem>>, vector<8x128xf32>
      tpu.vector_store %arg6[%c0_19, %c0_20], %22 {strides = array<i32>} : memref<8x128xf32, #tpu.memory_space<vmem>>, vector<8x128xf32>,
    } else {
    }
    return
  }
  func.func @transform_0(%arg0: i32) -> (i32, i32) {
    %c0_i32 = arith.constant 0 : i32
    %c0_i32_0 = arith.constant 0 : i32
    %c0_i32_1 = arith.constant 0 : i32
    return %c0_i32, %c0_i32_0 : i32, i32
  }
  func.func @transform_1(%arg0: i32) -> (i32, i32) {
    %c0_i32 = arith.constant 0 : i32
    %c0_i32_0 = arith.constant 0 : i32
    return %c0_i32, %arg0 : i32, i32
  }
  func.func @transform_2(%arg0: i32) -> (i32, i32) {
    %c0_i32 = arith.constant 0 : i32
    %c0_i32_0 = arith.constant 0 : i32
    return %arg0, %c0_i32 : i32, i32
  }
  func.func @transform_3(%arg0: i32) -> (i32, i32) {
    %c0_i32 = arith.constant 0 : i32
    %c0_i32_0 = arith.constant 0 : i32
    %c0_i32_1 = arith.constant 0 : i32
    return %c0_i32, %c0_i32_0 : i32, i32
  }
  func.func @transform_4(%arg0: i32) -> (i32, i32) {
    %c0_i32 = arith.constant 0 : i32
    %c0_i32_0 = arith.constant 0 : i32
    return %c0_i32, %arg0 : i32, i32
  }
  func.func @transform_5(%arg0: i32) -> (i32, i32) {
    %c0_i32 = arith.constant 0 : i32
    %c0_i32_0 = arith.constant 0 : i32
    %c0_i32_1 = arith.constant 0 : i32
    return %c0_i32, %c0_i32_0 : i32, i32
  }
}

</mosaic_0001>

<llo_original>
// kernel: img_backbone_head.1
$region0: #{img_backbone_head.1}
  #allocation0 [shape = 'u32[]', space=smem, size = 0x4, offset = 0x4, fixed_abs, tag = 'smem constant byte address 0x4 - core index']
  #allocation1 [shape = 'u32[144,128]{1,0:T(1,128)}', space=vmem, size = 0x12000, scoped, tag = 'internal scratch']
  #allocation2 [shape = 'f32[8,128]{1,0:T(8,128)}', space=vmem, size = 0x1000, scoped, tag = 'scratch operand']
  %s0 = inlined_call_operand.hbm [shape: f32[8,128], index: 0, kind: input, shape index: {}]
  %s1 = inlined_call_operand.hbm [shape: bf16[128,256], index: 1, kind: input, shape index: {}]
  %s2 = inlined_call_operand.hbm [shape: bf16[256,128], index: 2, kind: input, shape index: {}]
  %s3 = inlined_call_operand.vmem [shape: f32[1,128], index: 3, kind: input, shape index: {}]
  %s4 = inlined_call_operand.vmem [shape: f32[8,256], index: 4, kind: output, shape index: {0}]
  %s5 = inlined_call_operand.hbm [shape: f32[8,128], index: 5, kind: output, shape index: {1}]
  %6 = xla_tuple %s4, %s5
  %s7 = sld [smem:[#allocation0]]
  $region77: #{img_backbone_head.1} parent=0
    _
  %s9 = ssub.s32 1, %s7
  %s10 = scalar_select 0, %s9, %s7
  $region1: #{img_backbone_head.1} parent=0
    #allocation3 [shape = 'u8[4096]{0}', space=vmem, size = 0x1000, scoped, tag = 'input window, operand 0, single buffered']
    #allocation4 [shape = 's32[2]{0}', space=sflag, size = 0x8, scoped, tag = 'scoped memory for img_backbone_head.1']
    #allocation5 [shape = 's32[2]{0}', space=sflag, size = 0x8, scoped, tag = 'scoped memory for img_backbone_head.1']
    #allocation6 [shape = 'u8[65536]{0}', space=vmem, size = 0x10000, scoped, tag = 'input window, operand 1']
    #allocation7 [shape = 's32[2]{0}', space=sflag, size = 0x8, scoped, tag = 'scoped memory for img_backbone_head.1']
    #allocation8 [shape = 'u8[65536]{0}', space=vmem, size = 0x10000, scoped, tag = 'input window, operand 2']
    #allocation9 [shape = 'u8[4096]{0}', space=vmem, size = 0x1000, scoped, tag = 'output window, operand 1, single buffered']
    %11 = vsyncpa [#allocation4], 0
    %12 = vsyncpa [#allocation7], 0
    %s13 = scalar_lea.sflag [#allocation7], 1
    %14 = vsyncpa %s13, 0
    %15 = vsyncpa [#allocation5], 0
    loop: start=0, step=1, limit=4
    $region2: #{img_backbone_head.1} parent=1 // loop_pre_header
      _
    $region3: #{img_backbone_head.1} parent=1 // loop_header
      %s17 = sphi 0, %s21
      %p18 = scmp.ge.s32.totalorder %s17, 4
      %s25 = sphi 0, %s25
      %s27 = sphi 0, %s25
      %s28 = sphi 0, %s27
      %s42 = sphi 0, %s28
      %s48 = sphi 0, %s50
      %s51 = sphi 0, %s48
      %s52 = sphi 0, %s51
      %s68 = sphi 0, %s52
      %s74 = sphi 0, %s76
      %s77 = sphi 0, %s74
      %s78 = sphi 0, %s77
      %s94 = sphi 0, %s78
      %s98 = sphi 0, %s98
      %s100 = sphi 0, %s98
      %s101 = sphi 0, %s100
      %s115 = sphi 0, %s101
      %s121 = sphi 0, %s123
      %s124 = sphi 0, %s121
      %s125 = sphi 0, %s124
      %s141 = sphi 0, %s125
      %s145 = sphi 0, %s145
      %s147 = sphi 0, %s145
      %s148 = sphi 0, %s147
      %s162 = sphi 0, %s148
    $region4: #{img_backbone_head.1} parent=1 // loop_header_branch
      %20 = sbr.rel (%p18) target = $region8
    $region5: #{img_backbone_head.1} parent=1 // loop_body
      %s22 = ssub.s32 %s17, 1
      %s23 = ssub.s32 %s17, 2
      %s24 = sadd.s32 %s17, 1
      %s26 = sadd.s32 %s25, 1
      %p29 = scmp.eq.s32.totalorder %s17, 1
      %p30 = scmp.ne.s32.totalorder %s25, %s27
      %p31 = scmp.eq.s32.totalorder %s17, 0
      %p32 = por %p30, %p31
      %p33 = scmp.ne.s32.totalorder %s25, %s27
      %p34 = scmp.eq.s32.totalorder %s22, 1
      %p35 = por %p33, %p34
      %p36 = scmp.ne.s32.totalorder %s27, %s28
      %p37 = scmp.eq.s32.totalorder %s22, 0
      %p38 = por %p36, %p37
      %p39 = scmp.ne.s32.totalorder %s27, %s28
      %p40 = scmp.eq.s32.totalorder %s23, 1
      %p41 = por %p39, %p40
      %p43 = scmp.ne.s32.totalorder %s28, %s42
      %p44 = scmp.eq.s32.totalorder %s23, 0
      %p45 = por %p43, %p44
      %s46 = ssub.s32 %s17, %s24
      %p47 = scmp.eq.s32.totalorder %s46, 0
      %s49 = sadd.s32 %s48, 1
      %s50 = scalar_select %p47, %s48, %s49
      %p53 = pneg %p47
      %p54 = scmp.eq.s32.totalorder %s17, 1
      %p55 = por %p53, %p54
      %p56 = scmp.ne.s32.totalorder %s48, %s51
      %p57 = scmp.eq.s32.totalorder %s17, 0
      %p58 = por %p56, %p57
      %p59 = scmp.ne.s32.totalorder %s48, %s51
      %p60 = scmp.eq.s32.totalorder %s22, 1
      %p61 = por %p59, %p60
      %p62 = scmp.ne.s32.totalorder %s51, %s52
      %p63 = scmp.eq.s32.totalorder %s22, 0
      %p64 = por %p62, %p63
      %p65 = scmp.ne.s32.totalorder %s51, %s52
      %p66 = scmp.eq.s32.totalorder %s23, 1
      %p67 = por %p65, %p66
      %p69 = scmp.ne.s32.totalorder %s52, %s68
      %p70 = scmp.eq.s32.totalorder %s23, 0
      %p71 = por %p69, %p70
      %s72 = ssub.s32 %s17, %s24
      %p73 = scmp.eq.s32.totalorder %s72, 0
      %s75 = sadd.s32 %s74, 1
      %s76 = scalar_select %p73, %s74, %s75
      %p79 = pneg %p73
      %p80 = scmp.eq.s32.totalorder %s17, 1
      %p81 = por %p79, %p80
      %p82 = scmp.ne.s32.totalorder %s74, %s77
      %p83 = scmp.eq.s32.totalorder %s17, 0
      %p84 = por %p82, %p83
      %p85 = scmp.ne.s32.totalorder %s74, %s77
      %p86 = scmp.eq.s32.totalorder %s22, 1
      %p87 = por %p85, %p86
      %p88 = scmp.ne.s32.totalorder %s77, %s78
      %p89 = scmp.eq.s32.totalorder %s22, 0
      %p90 = por %p88, %p89
      %p91 = scmp.ne.s32.totalorder %s77, %s78
      %p92 = scmp.eq.s32.totalorder %s23, 1
      %p93 = por %p91, %p92
      %p95 = scmp.ne.s32.totalorder %s78, %s94
      %p96 = scmp.eq.s32.totalorder %s23, 0
      %p97 = por %p95, %p96
      %s99 = sadd.s32 %s98, 1
      %p102 = scmp.eq.s32.totalorder %s17, 1
      %p103 = scmp.ne.s32.totalorder %s98, %s100
      %p104 = scmp.eq.s32.totalorder %s17, 0
      %p105 = por %p103, %p104
      %p106 = scmp.ne.s32.totalorder %s98, %s100
      %p107 = scmp.eq.s32.totalorder %s22, 1
      %p108 = por %p106, %p107
      %p109 = scmp.ne.s32.totalorder %s100, %s101
      %p110 = scmp.eq.s32.totalorder %s22, 0
      %p111 = por %p109, %p110
      %p112 = scmp.ne.s32.totalorder %s100, %s101
      %p113 = scmp.eq.s32.totalorder %s23, 1
      %p114 = por %p112, %p113
      %p116 = scmp.ne.s32.totalorder %s101, %s115
      %p117 = scmp.eq.s32.totalorder %s23, 0
      %p118 = por %p116, %p117
      %s119 = ssub.s32 %s17, %s24
      %p120 = scmp.eq.s32.totalorder %s119, 0
      %s122 = sadd.s32 %s121, 1
      %s123 = scalar_select %p120, %s121, %s122
      %p126 = pneg %p120
      %p127 = scmp.eq.s32.totalorder %s17, 1
      %p128 = por %p126, %p127
      %p129 = scmp.ne.s32.totalorder %s121, %s124
      %p130 = scmp.eq.s32.totalorder %s17, 0
      %p131 = por %p129, %p130
      %p132 = scmp.ne.s32.totalorder %s121, %s124
      %p133 = scmp.eq.s32.totalorder %s22, 1
      %p134 = por %p132, %p133
      %p135 = scmp.ne.s32.totalorder %s124, %s125
      %p136 = scmp.eq.s32.totalorder %s22, 0
      %p137 = por %p135, %p136
      %p138 = scmp.ne.s32.totalorder %s124, %s125
      %p139 = scmp.eq.s32.totalorder %s23, 1
      %p140 = por %p138, %p139
      %p142 = scmp.ne.s32.totalorder %s125, %s141
      %p143 = scmp.eq.s32.totalorder %s23, 0
      %p144 = por %p142, %p143
      %s146 = sadd.s32 %s145, 1
      %p149 = scmp.eq.s32.totalorder %s17, 1
      %p150 = scmp.ne.s32.totalorder %s145, %s147
      %p151 = scmp.eq.s32.totalorder %s17, 0
      %p152 = por %p150, %p151
      %p153 = scmp.ne.s32.totalorder %s145, %s147
      %p154 = scmp.eq.s32.totalorder %s22, 1
      %p155 = por %p153, %p154
      %p156 = scmp.ne.s32.totalorder %s147, %s148
      %p157 = scmp.eq.s32.totalorder %s22, 0
      %p158 = por %p156, %p157
      %p159 = scmp.ne.s32.totalorder %s147, %s148
      %p160 = scmp.eq.s32.totalorder %s23, 1
      %p161 = por %p159, %p160
      %p163 = scmp.ne.s32.totalorder %s148, %s162
      %p164 = scmp.eq.s32.totalorder %s23, 0
      %p165 = por %p163, %p164
      %p166 = scmp.le.s32.totalorder 1, %s17
      %p167 = scmp.lt.s32.totalorder %s17, 3
      %p168 = pnand %p166, %p167
      %p169 = pneg %p168
      // Predicated region
      $region9: #{img_backbone_head.1} parent=5 // pred_check
        _
      $region10: #{img_backbone_head.1} parent=5 // pred_check_branch
        %171 = sbr.rel (%p168) target = $region12
      $region11: #{img_backbone_head.1} parent=5 // pred_region
        %s172 = ssub.s32 %s17, 1
        // Predicated region
        $region13: #{img_backbone_head.1} parent=11 // pred_check
          %p173 = pneg %p38
        $region14: #{img_backbone_head.1} parent=11 // pred_check_branch
          %175 = sbr.rel (%p173) target = $region16
        $region15: #{img_backbone_head.1} parent=11 // pred_region
          %s177 = ssub.s32 128, 128
          %178 = vsyncadd [#allocation4], %s177
          %s180 = sshll.u32 [#allocation3], 4
          %s181 = int_to_ptr.vmem [resolvable:$true] %s180
          %183 = dma.hbm_to_vmem [thread:$0]  %s0, 128, %s181, [#allocation4]
        $region16: #{img_backbone_head.1} parent=11 // pred_fallthru
          _
        // Predicated region
        $region17: #{img_backbone_head.1} parent=11 // pred_check
          %p184 = pneg %p111
        $region18: #{img_backbone_head.1} parent=11 // pred_check_branch
          %186 = sbr.rel (%p184) target = $region20
        $region19: #{img_backbone_head.1} parent=11 // pred_region
          _
        $region20: #{img_backbone_head.1} parent=11 // pred_fallthru
          _
      $region12: #{img_backbone_head.1} parent=5 // pred_fallthru
        _
      %p187 = scmp.lt.s32.totalorder %s17, 2
      // Predicated region
      $region21: #{img_backbone_head.1} parent=5 // pred_check
        %p188 = pneg %p187
      $region22: #{img_backbone_head.1} parent=5 // pred_check_branch
        %190 = sbr.rel (%p188) target = $region24
      $region23: #{img_backbone_head.1} parent=5 // pred_region
        // Predicated region
        $region25: #{img_backbone_head.1} parent=23 // pred_check
          %p191 = pneg %p58
        $region26: #{img_backbone_head.1} parent=23 // pred_check_branch
          %193 = sbr.rel (%p191) target = $region28
        $region27: #{img_backbone_head.1} parent=23 // pred_region
          %s194 = sand.u32 %s17, 1
          %s195 = scalar_lea.sflag [#allocation7], %s194
          %s196 = sand.u32 %s48, 1
          %s197 = smul.addr %s196, 64
          %s198 = scalar_lea.vmem [#allocation6], %s197
          %s200 = ssub.s32 1024, 1024
          %201 = vsyncadd %s195, %s200
          %s202 = smul.addr %s17, 64
          %s203 = scalar_lea.hbm %s1, %s202
          %s204 = sshll.u32 %s198, 4
          %s205 = int_to_ptr.vmem [resolvable:$true] %s204
          %210 = dma.hbm_to_vmem [thread:$0]  %s203, 1024, %s205, %s195, 128, 64, 4
        $region28: #{img_backbone_head.1} parent=23 // pred_fallthru
          _
        // Predicated region
        $region29: #{img_backbone_head.1} parent=23 // pred_check
          %p211 = pneg %p84
        $region30: #{img_backbone_head.1} parent=23 // pred_check_branch
          %213 = sbr.rel (%p211) target = $region32
        $region31: #{img_backbone_head.1} parent=23 // pred_region
          %s214 = sand.u32 %s17, 1
          %s215 = scalar_lea.sflag [#allocation7], %s214
          %s216 = sand.u32 %s74, 1
          %s217 = smul.addr %s216, 64
          %s218 = scalar_lea.vmem [#allocation8], %s217
          %s219 = smul.u32 16, %s17
          %s221 = ssub.s32 1024, 1024
          %222 = vsyncadd %s215, %s221
          %s223 = smul.addr %s219, 64
          %s224 = scalar_lea.hbm %s2, %s223
          %s225 = sshll.u32 %s218, 4
          %s226 = int_to_ptr.vmem [resolvable:$true] %s225
          %231 = dma.hbm_to_vmem [thread:$0]  %s224, 1024, %s226, %s215, 64, 64, 4
        $region32: #{img_backbone_head.1} parent=23 // pred_fallthru
          _
      $region24: #{img_backbone_head.1} parent=5 // pred_fallthru
        _
      %p232 = scmp.le.s32.totalorder 1, %s17
      %p233 = scmp.lt.s32.totalorder %s17, 3
      %p234 = pnand %p232, %p233
      %p235 = pneg %p234
      // Predicated region
      $region33: #{img_backbone_head.1} parent=5 // pred_check
        _
      $region34: #{img_backbone_head.1} parent=5 // pred_check_branch
        %237 = sbr.rel (%p234) target = $region36
      $region35: #{img_backbone_head.1} parent=5 // pred_region
        %s238 = ssub.s32 %s17, 1
        // Predicated region
        $region37: #{img_backbone_head.1} parent=35 // pred_check
          %p239 = pneg %p38
        $region38: #{img_backbone_head.1} parent=35 // pred_check_branch
          %241 = sbr.rel (%p239) target = $region40
        $region39: #{img_backbone_head.1} parent=35 // pred_region
          %242 = dma.done [#allocation4], 128
        $region40: #{img_backbone_head.1} parent=35 // pred_fallthru
          _
        %s243 = sand.u32 %s22, 1
        %s244 = scalar_lea.sflag [#allocation7], %s243
        %s245 = sand.u32 %s51, 1
        %s246 = smul.addr %s245, 64
        %s247 = scalar_lea.vmem [#allocation6], %s246
        // Predicated region
        $region41: #{img_backbone_head.1} parent=35 // pred_check
          %p248 = pneg %p64
        $region42: #{img_backbone_head.1} parent=35 // pred_check_branch
          %250 = sbr.rel (%p248) target = $region44
        $region43: #{img_backbone_head.1} parent=35 // pred_region
          %251 = dma.done %s244, 1024
        $region44: #{img_backbone_head.1} parent=35 // pred_fallthru
          _
        %s252 = sand.u32 %s22, 1
        %s253 = scalar_lea.sflag [#allocation7], %s252
        %s254 = sand.u32 %s77, 1
        %s255 = smul.addr %s254, 64
        %s256 = scalar_lea.vmem [#allocation8], %s255
        // Predicated region
        $region45: #{img_backbone_head.1} parent=35 // pred_check
          %p257 = pneg %p90
        $region46: #{img_backbone_head.1} parent=35 // pred_check_branch
          %259 = sbr.rel (%p257) target = $region48
        $region47: #{img_backbone_head.1} parent=35 // pred_region
          %260 = dma.done %s253, 1024
        $region48: #{img_backbone_head.1} parent=35 // pred_fallthru
          _
        %p261 = pneg %p38
        %p262 = pneg %p35
        %s263 = sand.u32 %s22, 1
        %s264 = scalar_lea.sflag [#allocation7], %s263
        %s265 = sand.u32 %s51, 1
        %s266 = smul.addr %s265, 64
        %s267 = scalar_lea.vmem [#allocation6], %s266
        %p268 = pneg %p64
        %p269 = pneg %p61
        %s270 = sand.u32 %s22, 1
        %s271 = scalar_lea.sflag [#allocation7], %s270
        %s272 = sand.u32 %s77, 1
        %s273 = smul.addr %s272, 64
        %s274 = scalar_lea.vmem [#allocation8], %s273
        %p275 = pneg %p90
        %p276 = pneg %p87
        %p277 = pneg %p111
        %p278 = pneg %p108
        %p279 = pneg %p137
        %p280 = pneg %p134
        %p281 = scmp.lt.s32.totalorder %s22, 1
        %s282 = scalar_select %p281, %s22, 1
        %s283 = smul.addr %s282, 8
        %s284 = scalar_lea.vmem %s4, %s283
        %p285 = pneg %p158
        %p286 = pneg %p155
        %s287 = smul.u32 16, %s22
        %p288 = scmp.lt.s32.totalorder %s22, 1
        %s289 = scalar_select %p288, %s22, 1
        %s290 = smul.addr %s289, 8
        %s291 = scalar_lea.vmem %s4, %s290
        %p293 = scmp.eq.s32.totalorder %s22, 0
        // Predicated region
        $region49: #{img_backbone_head.1} parent=35 // pred_check
          %p294 = pneg %p293
        $region50: #{img_backbone_head.1} parent=35 // pred_check_branch
          %296 = sbr.rel (%p294) target = $region52
        $region51: #{img_backbone_head.1} parent=35 // pred_region
          %297 = vst [vmem:[#allocation2] sm:$0xff] 0.0
        $region52: #{img_backbone_head.1} parent=35 // pred_fallthru
          _
        %v298 = vld [vmem:[#allocation3] sm:$0xff]
        %v299 = vpack.c.bf16 %v298, %v298
        %v300 = vld [vmem:[%s247] sm:$0xf]
        %v301 = vld [vmem:[%s247 + $0x4] sm:$0xf]
        %v302 = vld [vmem:[%s247 + $0x8] sm:$0xf]
        %v303 = vld [vmem:[%s247 + $0xc] sm:$0xf]
        %v304 = vld [vmem:[%s247 + $0x10] sm:$0xf]
        %v305 = vld [vmem:[%s247 + $0x14] sm:$0xf]
        %v306 = vld [vmem:[%s247 + $0x18] sm:$0xf]
        %v307 = vld [vmem:[%s247 + $0x1c] sm:$0xf]
        %v308 = vld [vmem:[%s247 + $0x20] sm:$0xf]
        %v309 = vld [vmem:[%s247 + $0x24] sm:$0xf]
        %v310 = vld [vmem:[%s247 + $0x28] sm:$0xf]
        %v311 = vld [vmem:[%s247 + $0x2c] sm:$0xf]
        %v312 = vld [vmem:[%s247 + $0x30] sm:$0xf]
        %v313 = vld [vmem:[%s247 + $0x34] sm:$0xf]
        %v314 = vld [vmem:[%s247 + $0x38] sm:$0xf]
        %v315 = vld [vmem:[%s247 + $0x3c] sm:$0xf]
        %v332 = vunpack.c.l.b16 %v300
        %v333 = vunpack.c.l.b16 %v301
        %v334 = vunpack.c.l.b16 %v302
        %v335 = vunpack.c.l.b16 %v303
        %v336 = vunpack.c.l.b16 %v304
        %v337 = vunpack.c.l.b16 %v305
        %v338 = vunpack.c.l.b16 %v306
        %v339 = vunpack.c.l.b16 %v307
        %v340 = vunpack.c.l.b16 %v308
        %v341 = vunpack.c.l.b16 %v309
        %v342 = vunpack.c.l.b16 %v310
        %v343 = vunpack.c.l.b16 %v311
        %v344 = vunpack.c.l.b16 %v312
        %v345 = vunpack.c.l.b16 %v313
        %v346 = vunpack.c.l.b16 %v314
        %v347 = vunpack.c.l.b16 %v315
        %v348 = vpack.c.b16 %v333, %v332
        %v349 = vpack.c.b16 %v335, %v334
        %v350 = vpack.c.b16 %v337, %v336
        %v351 = vpack.c.b16 %v339, %v338
        %v352 = vpack.c.b16 %v341, %v340
        %v353 = vpack.c.b16 %v343, %v342
        %v354 = vpack.c.b16 %v345, %v344
        %v355 = vpack.c.b16 %v347, %v346
        %364 = vmatprep.subr.bf16.mxu0 0
        %365 = vmatpush1.bf16.msra.mxu0 %v348
        %366 = vmatprep.subr.bf16.mxu0 0
        %367 = vmatpush1.bf16.msra.mxu0 %v349
        %368 = vmatprep.subr.bf16.mxu0 0
        %369 = vmatpush1.bf16.msra.mxu0 %v350
        %370 = vmatprep.subr.bf16.mxu0 0
        %371 = vmatpush1.bf16.msra.mxu0 %v351
        %372 = vmatprep.subr.bf16.mxu0 0
        %373 = vmatpush1.bf16.msra.mxu0 %v352
        %374 = vmatprep.subr.bf16.mxu0 0
        %375 = vmatpush1.bf16.msra.mxu0 %v353
        %376 = vmatprep.subr.bf16.mxu0 0
        %377 = vmatpush1.bf16.msra.mxu0 %v354
        %378 = vmatprep.subr.bf16.mxu0 0
        %379 = vmatpush1.bf16.msra.mxu0 %v355
        %380 = vmatprep.subr.bf16.mxu0 0
        %381 = vmatpush1.bf16.msra.mxu0 0
        %382 = vmatprep.subr.bf16.mxu0 0
        %383 = vmatpush1.bf16.msra.mxu0 0
        %384 = vmatprep.subr.bf16.mxu0 0
        %385 = vmatpush1.bf16.msra.mxu0 0
        %386 = vmatprep.subr.bf16.mxu0 0
        %387 = vmatpush1.bf16.msra.mxu0 0
        %388 = vmatprep.subr.bf16.mxu0 0
        %389 = vmatpush1.bf16.msra.mxu0 0
        %390 = vmatprep.subr.bf16.mxu0 0
        %391 = vmatpush1.bf16.msra.mxu0 0
        %392 = vmatprep.subr.bf16.mxu0 0
        %393 = vmatpush1.bf16.msra.mxu0 0
        %394 = vmatprep.subr.bf16.mxu0 0
        %395 = vmatpush1.bf16.msra.mxu0 0
        %396 = vmatprep.mubr.bf16.mxu0 0
        %397 = vmatmul.mubr.bf16.gmra.mrb[0].mxu0 %v299
        %v398 = vpop.f32.mrb[0].mxu0
        %v399 = vadd.f32 0.0, %v398
        %v400 = vpop.f32.mrb[0].mxu0
        %v401 = vpop.f32.mrb[0].mxu0
        %v402 = vpop.f32.mrb[0].mxu0
        %403 = vdwg.mxu0
        %404 = vst [vmem:[%s291] sm:$0xff] %v399
        %v405 = vmax.f32 %v399, 1e-06
        %v406 = vld [vmem:[#allocation2] sm:$0xff]
        %v407 = vpack.c.bf16 %v405, %v405
        %v408 = vld [vmem:[%s256] sm:$0xf]
        %v409 = vld [vmem:[%s256 + $0x4] sm:$0xf]
        %v410 = vld [vmem:[%s256 + $0x8] sm:$0xf]
        %v411 = vld [vmem:[%s256 + $0xc] sm:$0xf]
        %v412 = vld [vmem:[%s256 + $0x10] sm:$0xf]
        %v413 = vld [vmem:[%s256 + $0x14] sm:$0xf]
        %v414 = vld [vmem:[%s256 + $0x18] sm:$0xf]
        %v415 = vld [vmem:[%s256 + $0x1c] sm:$0xf]
        %v416 = vld [vmem:[%s256 + $0x20] sm:$0xf]
        %v417 = vld [vmem:[%s256 + $0x24] sm:$0xf]
        %v418 = vld [vmem:[%s256 + $0x28] sm:$0xf]
        %v419 = vld [vmem:[%s256 + $0x2c] sm:$0xf]
        %v420 = vld [vmem:[%s256 + $0x30] sm:$0xf]
        %v421 = vld [vmem:[%s256 + $0x34] sm:$0xf]
        %v422 = vld [vmem:[%s256 + $0x38] sm:$0xf]
        %v423 = vld [vmem:[%s256 + $0x3c] sm:$0xf]
        %v440 = vunpack.c.l.b16 %v408
        %v441 = vunpack.c.l.b16 %v409
        %v442 = vunpack.c.l.b16 %v410
        %v443 = vunpack.c.l.b16 %v411
        %v444 = vunpack.c.l.b16 %v412
        %v445 = vunpack.c.l.b16 %v413
        %v446 = vunpack.c.l.b16 %v414
        %v447 = vunpack.c.l.b16 %v415
        %v448 = vunpack.c.l.b16 %v416
        %v449 = vunpack.c.l.b16 %v417
        %v450 = vunpack.c.l.b16 %v418
        %v451 = vunpack.c.l.b16 %v419
        %v452 = vunpack.c.l.b16 %v420
        %v453 = vunpack.c.l.b16 %v421
        %v454 = vunpack.c.l.b16 %v422
        %v455 = vunpack.c.l.b16 %v423
        %v456 = vpack.c.b16 %v441, %v440
        %v457 = vpack.c.b16 %v443, %v442
        %v458 = vpack.c.b16 %v445, %v444
        %v459 = vpack.c.b16 %v447, %v446
        %v460 = vpack.c.b16 %v449, %v448
        %v461 = vpack.c.b16 %v451, %v450
        %v462 = vpack.c.b16 %v453, %v452
        %v463 = vpack.c.b16 %v455, %v454
        %472 = vmatprep.subr.bf16.mxu0 0
        %473 = vmatpush1.bf16.msra.mxu0 %v456
        %474 = vmatprep.subr.bf16.mxu0 0
        %475 = vmatpush1.bf16.msra.mxu0 %v457
        %476 = vmatprep.subr.bf16.mxu0 0
        %477 = vmatpush1.bf16.msra.mxu0 %v458
        %478 = vmatprep.subr.bf16.mxu0 0
        %479 = vmatpush1.bf16.msra.mxu0 %v459
        %480 = vmatprep.subr.bf16.mxu0 0
        %481 = vmatpush1.bf16.msra.mxu0 %v460
        %482 = vmatprep.subr.bf16.mxu0 0
        %483 = vmatpush1.bf16.msra.mxu0 %v461
        %484 = vmatprep.subr.bf16.mxu0 0
        %485 = vmatpush1.bf16.msra.mxu0 %v462
        %486 = vmatprep.subr.bf16.mxu0 0
        %487 = vmatpush1.bf16.msra.mxu0 %v463
        %488 = vmatprep.subr.bf16.mxu0 0
        %489 = vmatpush1.bf16.msra.mxu0 0
        %490 = vmatprep.subr.bf16.mxu0 0
        %491 = vmatpush1.bf16.msra.mxu0 0
        %492 = vmatprep.subr.bf16.mxu0 0
        %493 = vmatpush1.bf16.msra.mxu0 0
        %494 = vmatprep.subr.bf16.mxu0 0
        %495 = vmatpush1.bf16.msra.mxu0 0
        %496 = vmatprep.subr.bf16.mxu0 0
        %497 = vmatpush1.bf16.msra.mxu0 0
        %498 = vmatprep.subr.bf16.mxu0 0
        %499 = vmatpush1.bf16.msra.mxu0 0
        %500 = vmatprep.subr.bf16.mxu0 0
        %501 = vmatpush1.bf16.msra.mxu0 0
        %502 = vmatprep.subr.bf16.mxu0 0
        %503 = vmatpush1.bf16.msra.mxu0 0
        %504 = vmatprep.mubr.bf16.mxu0 0
        %505 = vmatmul.mubr.bf16.gmra.mrb[0].mxu0 %v407
        %v506 = vpop.f32.mrb[0].mxu0
        %v507 = vadd.f32 0.0, %v506
        %v508 = vpop.f32.mrb[0].mxu0
        %v509 = vpop.f32.mrb[0].mxu0
        %v510 = vpop.f32.mrb[0].mxu0
        %511 = vdwg.mxu0
        %v512 = vadd.f32 %v406, %v507
        %513 = vst [vmem:[#allocation2] sm:$0xff] %v512
        %p514 = scmp.eq.s32.totalorder %s22, 1
        // Predicated region
        $region53: #{img_backbone_head.1} parent=35 // pred_check
          %p515 = pneg %p514
        $region54: #{img_backbone_head.1} parent=35 // pred_check_branch
          %517 = sbr.rel (%p515) target = $region56
        $region55: #{img_backbone_head.1} parent=35 // pred_region
          %v518 = vld [vmem:[#allocation2] sm:$0xff]
          %v519 = vld [vmem:[%s3] sm:$0x1]
          %v521 = vlaneseq
          %v522 = vshrl.u32 %v521, 7
          %v523 = vsub.s32 0, %v522
          %v524 = vrot.slane %v519, %v523
          %v526 = vadd.f32 %v518, %v524
          %527 = vst [vmem:[#allocation9] sm:$0xff] %v526
        $region56: #{img_backbone_head.1} parent=35 // pred_fallthru
          _
        %p528 = scmp.lt.s32.totalorder %s22, 1
        %s529 = scalar_select %p528, %s22, 1
        %s530 = smul.addr %s529, 8
        %s531 = scalar_lea.vmem %s4, %s530
        // Predicated region
        $region57: #{img_backbone_head.1} parent=35 // pred_check
          %p532 = pneg %p134
        $region58: #{img_backbone_head.1} parent=35 // pred_check_branch
          %534 = sbr.rel (%p532) target = $region60
        $region59: #{img_backbone_head.1} parent=35 // pred_region
          _
        $region60: #{img_backbone_head.1} parent=35 // pred_fallthru
          _
        // Predicated region
        $region61: #{img_backbone_head.1} parent=35 // pred_check
          %p535 = pneg %p155
        $region62: #{img_backbone_head.1} parent=35 // pred_check_branch
          %537 = sbr.rel (%p535) target = $region64
        $region63: #{img_backbone_head.1} parent=35 // pred_region
          %s539 = ssub.s32 128, 128
          %540 = vsyncadd [#allocation5], %s539
          %s542 = sshll.u32 [#allocation9], 4
          %s543 = int_to_ptr.vmem [resolvable:$true] %s542
          %545 = dma.vmem_to_hbm [thread:$0]  %s543, 128, %s5, [#allocation5]
        $region64: #{img_backbone_head.1} parent=35 // pred_fallthru
          _
        // Predicated region
        $region65: #{img_backbone_head.1} parent=35 // pred_check
          %p546 = pneg %p155
        $region66: #{img_backbone_head.1} parent=35 // pred_check_branch
          %548 = sbr.rel (%p546) target = $region68
        $region67: #{img_backbone_head.1} parent=35 // pred_region
          %549 = dma.done [#allocation5], 128
        $region68: #{img_backbone_head.1} parent=35 // pred_fallthru
          _
      $region36: #{img_backbone_head.1} parent=5 // pred_fallthru
        _
      %p550 = scmp.le.s32.totalorder 2, %s17
      // Predicated region
      $region69: #{img_backbone_head.1} parent=5 // pred_check
        %p551 = pneg %p550
      $region70: #{img_backbone_head.1} parent=5 // pred_check_branch
        %553 = sbr.rel (%p551) target = $region72
      $region71: #{img_backbone_head.1} parent=5 // pred_region
        %s554 = ssub.s32 %s17, 2
        // Predicated region
        $region73: #{img_backbone_head.1} parent=71 // pred_check
          %p555 = pneg %p140
        $region74: #{img_backbone_head.1} parent=71 // pred_check_branch
          %557 = sbr.rel (%p555) target = $region76
        $region75: #{img_backbone_head.1} parent=71 // pred_region
          %p558 = scmp.lt.s32.totalorder %s23, 1
          %s559 = scalar_select %p558, %s23, 1
          %s560 = smul.addr %s559, 8
          %s561 = scalar_lea.vmem %s4, %s560
        $region76: #{img_backbone_head.1} parent=71 // pred_fallthru
          _
      $region72: #{img_backbone_head.1} parent=5 // pred_fallthru
        _
    $region6: #{img_backbone_head.1} parent=1 // loop_footer
      %s21 = sadd.s32 1, %s17
    $region7: #{img_backbone_head.1} parent=1 // loop_footer_branch
      %16 = sbr.rel target = $region3
    $region8: #{img_backbone_head.1} parent=1 // loop_exit
      _
    %562 = vsyncpa [#allocation4], 1
    %s563 = scalar_lea.sflag [#allocation4], 1
    %564 = vsyncpa %s563, 1
    %565 = vsyncpa [#allocation7], 1
    %s566 = scalar_lea.sflag [#allocation7], 1
    %567 = vsyncpa %s566, 1
    %568 = vsyncpa [#allocation5], 1
    %s569 = scalar_lea.sflag [#allocation5], 1
    %570 = vsyncpa %s569, 1

</llo_original>
